<compile_context>
chip_gen: v5e
topology: v5e:2x2
jax: 0.10.0
libtpu: 0.0.40
codegen_flags: <defaults>
</compile_context>

<pallas_src>
import functools

import jax
import jax.numpy as jnp
from jax import lax
from jax.experimental import pallas as pl
from jax.experimental.pallas import tpu as pltpu

LANE = 128
CHUNK_ROWS = 1024              # in-kernel compute chunk (bounds f32 temps ~0.5 MiB each)
TARGET_BLOCK_BYTES = 4 << 20   # ~4 MiB of DMA per operand per grid step
VMEM_LIMIT_BYTES = 32 << 20    # 16 MiB double-buffered windows + chunked temps + headroom


def _round_up(x, m):
    return ((x + m - 1) // m) * m


def _huber_partial_kernel(yt_ref, yp_ref, part_ref, *, delta, block_rows,
                          chunk_rows, valid_rows, need_mask):
    """One grid step: fold a (block_rows, 128) tile into an (8, 128) partial sum."""
    n_chunks = block_rows // chunk_rows
    base_row = pl.program_id(0) * block_rows

    def body(c, acc):
        r0 = pl.multiple_of(c * chunk_rows, chunk_rows)
        # Upcast in-kernel: inputs stream in their native dtype.
        yt = yt_ref[pl.ds(r0, chunk_rows), :].astype(jnp.float32)
        yp = yp_ref[pl.ds(r0, chunk_rows), :].astype(jnp.float32)
        err = yt - yp
        if need_mask:
            # Rows past the true extent (partial last block) contain garbage;
            # zeroing err makes their loss exactly 0 (small branch: 0.5*0*0).
            row = (base_row + r0
                   + lax.broadcasted_iota(jnp.int32, (chunk_rows, LANE), 0))
            err = jnp.where(row < valid_rows, err, 0.0)
        abs_err = jnp.abs(err)
        small = 0.5 * err * err
        large = delta * (abs_err - 0.5 * delta)
        loss = jnp.where(abs_err <= delta, small, large)
        # Fold the sublane axis down to one (8, 128) vreg with VPU adds only.
        return acc + jnp.sum(loss.reshape(chunk_rows // 8, 8, LANE), axis=0)

    acc = lax.fori_loop(0, n_chunks, body, jnp.zeros((8, LANE), jnp.float32))
    part_ref[0] = acc


def _huber_sum_small(yt, yp, delta):
    """Plain-JAX Huber *sum* for tiny ragged tails (< 128 elements)."""
    err = yt.astype(jnp.float32) - yp.astype(jnp.float32)
    abs_err = jnp.abs(err)
    small = 0.5 * err * err
    large = delta * (abs_err - 0.5 * delta)
    return jnp.sum(jnp.where(abs_err <= delta, small, large))


def huber_loss(y_true, y_pred, delta=1.0):
    """Pallas TPU implementation of HuberLoss.forward (returns a scalar)."""
    assert y_true.shape == y_pred.shape
    delta = float(delta)
    total_n = y_true.size

    yt = y_true.reshape(-1)
    yp = y_pred.reshape(-1)

    # Lane-align without padding the full arrays.  The common case
    # (total_n % 128 == 0, i.e. most NN tensors) is a zero-copy reshape; only
    # a genuinely ragged tail (< 128 elems) is split off and reduced in JAX.
    main_n = (total_n // LANE) * LANE
    tail_n = total_n - main_n
    tail_sum = (_huber_sum_small(yt[main_n:], yp[main_n:], delta)
                if tail_n else jnp.float32(0.0))
    if main_n == 0:
        return tail_sum / jnp.float32(total_n)
    if tail_n:
        # Sanctioned fallback for ragged sizes: aligned prefix to the kernel,
        # tiny tail in plain JAX (no full-array jnp.pad of both inputs).
        yt = yt[:main_n]
        yp = yp[:main_n]

    rows = main_n // LANE
    yt = yt.reshape(rows, LANE)
    yp = yp.reshape(rows, LANE)

    # Dtype-aware block sizing: same ~4 MiB of DMA per operand per grid step
    # (8192 rows f32, 16384 rows bf16, 32768 rows int8/fp8).
    itemsizes = [jnp.dtype(y_true.dtype).itemsize, jnp.dtype(y_pred.dtype).itemsize]
    min_item = min(itemsizes)
    sub_min = max((8 * (4 // it)) if it <= 4 else 8 for it in itemsizes)
    preferred_rows = TARGET_BLOCK_BYTES // (LANE * min_item)

    if rows >= preferred_rows:
        block_rows = preferred_rows
        chunk_rows = CHUNK_ROWS
    else:
        block_rows = _round_up(rows, sub_min)
        if block_rows > CHUNK_ROWS:
            block_rows = _round_up(block_rows, CHUNK_ROWS)
            chunk_rows = CHUNK_ROWS
        else:
            chunk_rows = block_rows

    num_blocks = pl.cdiv(rows, block_rows)
    need_mask = (rows % block_rows) != 0   # partial last block -> mask in-kernel

    kernel = functools.partial(
        _huber_partial_kernel, delta=delta, block_rows=block_rows,
        chunk_rows=chunk_rows, valid_rows=rows, need_mask=need_mask)

    partials = pl.pallas_call(
        kernel,
        out_shape=jax.ShapeDtypeStruct((num_blocks, 8, LANE), jnp.float32),
        grid_spec=pltpu.PrefetchScalarGridSpec(
            num_scalar_prefetch=0,
            grid=(num_blocks,),
            in_specs=[
                pl.BlockSpec((block_rows, LANE), lambda i: (i, 0)),
                pl.BlockSpec((block_rows, LANE), lambda i: (i, 0)),
            ],
            out_specs=pl.BlockSpec((1, 8, LANE), lambda i: (i, 0, 0)),
        ),
        compiler_params=pltpu.CompilerParams(
            # No carried state across grid steps -> "parallel" lets the
            # runtime shard blocks across both TensorCores on v7x
            # (measured no-op on single-TC v5e/v6e).
            dimension_semantics=("parallel",),
            vmem_limit_bytes=VMEM_LIMIT_BYTES,
        ),
    )(yt, yp)

    return (jnp.sum(partials, dtype=jnp.float32) + tail_sum) / jnp.float32(total_n)


def huber_loss_ref(y_true, y_pred, delta=1.0):
    err = y_true.astype(jnp.float32) - y_pred.astype(jnp.float32)
    abs_err = jnp.abs(err)
    small = 0.5 * err * err
    large = delta * (abs_err - 0.5 * delta)
    return jnp.mean(jnp.where(abs_err <= delta, small, large))


if __name__ == "__main__":
    key = jax.random.PRNGKey(0)
    k1, k2 = jax.random.split(key)

    # NCHW: batch=2, channels=4, spatial=16x16 -> 2048 elems (lane-aligned, copy-free path)
    y_true = jax.random.normal(k1, (2, 4, 16, 16), dtype=jnp.float32) * 2.0
    y_pred = jax.random.normal(k2, (2, 4, 16, 16), dtype=jnp.float32) * 2.0
    out = jax.block_until_ready(huber_loss(y_true, y_pred, delta=1.0))
    ref = huber_loss_ref(y_true, y_pred, delta=1.0)
    assert jnp.allclose(out, ref, rtol=1e-5, atol=1e-6), (out, ref)

    # Non-lane-aligned shape: exercises the in-kernel mask + JAX ragged tail.
    k3, k4 = jax.random.split(k1)
    a = jax.random.normal(k3, (3, 5, 7, 11), dtype=jnp.float32) * 2.0
    b = jax.random.normal(k4, (3, 5, 7, 11), dtype=jnp.float32) * 2.0
    out2 = jax.block_until_ready(huber_loss(a, b, delta=1.0))
    ref2 = huber_loss_ref(a, b, delta=1.0)
    assert jnp.allclose(out2, ref2, rtol=1e-5, atol=1e-6), (out2, ref2)

    # bf16 inputs: exercises native-dtype streaming + dtype-aware block sizing.
    at = (jax.random.normal(k2, (2, 4, 16, 16), dtype=jnp.float32) * 2.0).astype(jnp.bfloat16)
    bt = (jax.random.normal(k4, (2, 4, 16, 16), dtype=jnp.float32) * 2.0).astype(jnp.bfloat16)
    out3 = jax.block_until_ready(huber_loss(at, bt, delta=1.0))
    ref3 = huber_loss_ref(at, bt, delta=1.0)
    assert jnp.allclose(out3, ref3, rtol=1e-5, atol=1e-6), (out3, ref3)

    print("KERNEL_OK")
</pallas_src>

<mosaic_0001>
module attributes {stable_mosaic.version = 11 : i64} {
  func.func @_huber_partial_kernel(%arg0: i32, %arg1: memref<16x128xf32, #tpu.memory_space<vmem>>, %arg2: memref<16x128xf32, #tpu.memory_space<vmem>>, %arg3: memref<1x8x128xf32, #tpu.memory_space<vmem>>) attributes {dimension_semantics = [#tpu.dimension_semantics<parallel>], iteration_bounds = array<i64: 1>, scalar_prefetch = 0 : i64, scratch_operands = 0 : i64, tpu.core_type = #tpu.core_type<tc>, window_params = [{transform_indices = @transform_0, window_bounds = array<i64: 16, 128>}, {transform_indices = @transform_1, window_bounds = array<i64: 16, 128>}, {transform_indices = @transform_2, window_bounds = array<i64: 1, 8, 128>}]} {
    %cst = arith.constant 0.000000e+00 : f32
    %0 = vector.broadcast %cst : f32 to vector<8x128xf32>
    %c0_i32 = arith.constant 0 : i32
    %c16_i32 = arith.constant 16 : i32
    %1 = arith.muli %c0_i32, %c16_i32 : i32
    %2 = tpu.assume_multiple %1, 16 : i32
    %3 = arith.index_cast %2 : i32 to index
    %c0 = arith.constant 0 : index
    %4 = vector.load %arg1[%3, %c0] : memref<16x128xf32, #tpu.memory_space<vmem>>, vector<16x128xf32>
    %5 = arith.index_cast %2 : i32 to index
    %c0_0 = arith.constant 0 : index
    %6 = vector.load %arg2[%5, %c0_0] : memref<16x128xf32, #tpu.memory_space<vmem>>, vector<16x128xf32>
    %7 = arith.subf %4, %6 : vector<16x128xf32>
    %8 = math.absf %7 : vector<16x128xf32>
    %cst_1 = arith.constant 5.000000e-01 : f32
    %9 = vector.broadcast %cst_1 : f32 to vector<16x128xf32>
    %10 = arith.mulf %9, %7 : vector<16x128xf32>
    %11 = arith.mulf %10, %7 : vector<16x128xf32>
    %cst_2 = arith.constant 5.000000e-01 : f32
    %12 = vector.broadcast %cst_2 : f32 to vector<16x128xf32>
    %13 = arith.subf %8, %12 : vector<16x128xf32>
    %cst_3 = arith.constant 1.000000e+00 : f32
    %14 = vector.broadcast %cst_3 : f32 to vector<16x128xf32>
    %15 = arith.mulf %14, %13 : vector<16x128xf32>
    %cst_4 = arith.constant 1.000000e+00 : f32
    %16 = vector.broadcast %cst_4 : f32 to vector<16x128xf32>
    %17 = arith.cmpf ole, %8, %16 : vector<16x128xf32>
    %18 = arith.select %17, %11, %15 : vector<16x128xi1>, vector<16x128xf32>
    %19 = vector.shape_cast %18 : vector<16x128xf32> to vector<2x8x128xf32>
    %cst_5 = arith.constant dense<0.000000e+00> : vector<8x128xf32>
    %20 = vector.multi_reduction <add>, %19, %cst_5 [0] : vector<2x8x128xf32> to vector<8x128xf32>
    %21 = arith.addf %0, %20 : vector<8x128xf32>
    %c1_i32 = arith.constant 1 : i32
    %c0_6 = arith.constant 0 : index
    %c0_7 = arith.constant 0 : index
    %c0_8 = arith.constant 0 : index
    %22 = vector.load %arg3[%c0_6, %c0_7, %c0_8] : memref<1x8x128xf32, #tpu.memory_space<vmem>>, vector<1x8x128xf32>
    %23 = vector.shape_cast %22 : vector<1x8x128xf32> to vector<8x128xf32>
    %24 = vector.shape_cast %21 : vector<8x128xf32> to vector<1x8x128xf32>
    tpu.vector_store %arg3[%c0_6, %c0_7, %c0_8], %24 {strides = array<i32>} : memref<1x8x128xf32, #tpu.memory_space<vmem>>, vector<1x8x128xf32>,
    return
  }
  func.func @transform_0(%arg0: i32) -> (i32, i32) {
    %c0_i32 = arith.constant 0 : i32
    %c0_i32_0 = arith.constant 0 : i32
    return %arg0, %c0_i32 : i32, i32
  }
  func.func @transform_1(%arg0: i32) -> (i32, i32) {
    %c0_i32 = arith.constant 0 : i32
    %c0_i32_0 = arith.constant 0 : i32
    return %arg0, %c0_i32 : i32, i32
  }
  func.func @transform_2(%arg0: i32) -> (i32, i32, i32) {
    %c0_i32 = arith.constant 0 : i32
    %c0_i32_0 = arith.constant 0 : i32
    %c0_i32_1 = arith.constant 0 : i32
    return %arg0, %c0_i32, %c0_i32_0 : i32, i32, i32
  }
}

</mosaic_0001>

<llo_original>
// kernel: tpu_custom_call.1
$region0: #{tpu_custom_call.1}
  #allocation0 [shape = 'u32[]', space=smem, size = 0x4, offset = 0x4, fixed_abs, tag = 'smem constant byte address 0x4 - core index']
  #allocation1 [shape = 'u32[72,128]{1,0:T(1,128)}', space=vmem, size = 0x9000, scoped, tag = 'internal scratch']
  %s0 = inlined_call_operand.hbm [shape: f32[16,128], index: 0, kind: input, shape index: {}]
  %s1 = inlined_call_operand.hbm [shape: f32[16,128], index: 1, kind: input, shape index: {}]
  %s2 = inlined_call_operand.hbm [shape: f32[1,8,128], index: 2, kind: output, shape index: {}]
  %s3 = sld [smem:[#allocation0]]
  $region26: #{tpu_custom_call.1} parent=0
    _
  %s5 = ssub.s32 1, %s3
  %s6 = scalar_select 0, %s5, %s3
  $region1: #{tpu_custom_call.1} parent=0
    #allocation2 [shape = 'u8[8192]{0}', space=vmem, size = 0x2000, scoped, tag = 'input window, operand 0, single buffered']
    #allocation3 [shape = 's32[1]{0}', space=sflag, size = 0x4, scoped, tag = 'scoped memory for tpu_custom_call.1']
    #allocation4 [shape = 's32[1]{0}', space=sflag, size = 0x4, scoped, tag = 'scoped memory for tpu_custom_call.1']
    #allocation5 [shape = 'u8[8192]{0}', space=vmem, size = 0x2000, scoped, tag = 'input window, operand 1, single buffered']
    #allocation6 [shape = 's32[1]{0}', space=sflag, size = 0x4, scoped, tag = 'scoped memory for tpu_custom_call.1']
    #allocation7 [shape = 'u8[4096]{0}', space=vmem, size = 0x1000, scoped, tag = 'output window, operand 0, single buffered']
    %7 = vsyncpa [#allocation3], 0
    %8 = vsyncpa [#allocation6], 0
    %9 = vsyncpa [#allocation4], 0
    // Predicated region
    $region2: #{tpu_custom_call.1} parent=1 // pred_check
      _
    $region3: #{tpu_custom_call.1} parent=1 // pred_check_branch
      %11 = sbr.rel (0) target = $region5
    $region4: #{tpu_custom_call.1} parent=1 // pred_region
      %13 = vsyncadd [#allocation3], 0
      %s14 = sshll.u32 %s0, 4
      %s15 = int_to_ptr.hbm [resolvable:$true] %s14
      %s16 = sshll.u32 [#allocation2], 4
      %s17 = int_to_ptr.vmem [resolvable:$true] %s16
      %22 = dma.hbm_to_vmem [thread:$0]  %s15, 256, %s17, [#allocation3], 128, 128, 8
    $region5: #{tpu_custom_call.1} parent=1 // pred_fallthru
      _
    // Predicated region
    $region6: #{tpu_custom_call.1} parent=1 // pred_check
      _
    $region7: #{tpu_custom_call.1} parent=1 // pred_check_branch
      %24 = sbr.rel (0) target = $region9
    $region8: #{tpu_custom_call.1} parent=1 // pred_region
      %26 = vsyncadd [#allocation6], 0
      %s27 = sshll.u32 %s1, 4
      %s28 = int_to_ptr.hbm [resolvable:$true] %s27
      %s29 = sshll.u32 [#allocation5], 4
      %s30 = int_to_ptr.vmem [resolvable:$true] %s29
      %35 = dma.hbm_to_vmem [thread:$0]  %s28, 256, %s30, [#allocation6], 128, 128, 8
    $region9: #{tpu_custom_call.1} parent=1 // pred_fallthru
      _
    // Predicated region
    $region10: #{tpu_custom_call.1} parent=1 // pred_check
      _
    $region11: #{tpu_custom_call.1} parent=1 // pred_check_branch
      %37 = sbr.rel (0) target = $region13
    $region12: #{tpu_custom_call.1} parent=1 // pred_region
      %39 = dma.done [#allocation3], 256
    $region13: #{tpu_custom_call.1} parent=1 // pred_fallthru
      _
    // Predicated region
    $region14: #{tpu_custom_call.1} parent=1 // pred_check
      _
    $region15: #{tpu_custom_call.1} parent=1 // pred_check_branch
      %41 = sbr.rel (0) target = $region17
    $region16: #{tpu_custom_call.1} parent=1 // pred_region
      %43 = dma.done [#allocation6], 256
    $region17: #{tpu_custom_call.1} parent=1 // pred_fallthru
      _
    %v44 = vld [vmem:[#allocation2] sm:$0xff]
    %v45 = vld [vmem:[#allocation2 + $0x8] sm:$0xff]
    %v46 = vld [vmem:[#allocation5] sm:$0xff]
    %v47 = vld [vmem:[#allocation5 + $0x8] sm:$0xff]
    %v48 = vsub.f32 %v44, %v46
    %v49 = vsub.f32 %v45, %v47
    %v50 = vand.u32 2147483647, %v48
    %v51 = vand.u32 2147483647, %v49
    %v52 = vmul.f32 %v48, 0.5
    %v53 = vmul.f32 %v49, 0.5
    %v54 = vmul.f32 %v52, %v48
    %v55 = vmul.f32 %v53, %v49
    %v56 = vsub.f32 %v50, 0.5
    %v57 = vsub.f32 %v51, 0.5
    %vm58 = vcmp.le.f32.partialorder %v50, 1.0
    %vm59 = vcmp.le.f32.partialorder %v51, 1.0
    %v60 = vsel %vm58, %v54, %v56
    %v61 = vsel %vm59, %v55, %v57
    %v62 = vadd.f32 %v60, %v61
    %v63 = vadd.f32 %v62, 0.0
    %64 = vst [vmem:[#allocation7] sm:$0xff] %v63
    // Predicated region
    $region18: #{tpu_custom_call.1} parent=1 // pred_check
      _
    $region19: #{tpu_custom_call.1} parent=1 // pred_check_branch
      %66 = sbr.rel (0) target = $region21
    $region20: #{tpu_custom_call.1} parent=1 // pred_region
      %68 = vsyncadd [#allocation4], 0
      %s70 = sshll.u32 [#allocation7], 4
      %s71 = int_to_ptr.vmem [resolvable:$true] %s70
      %s72 = sshll.u32 %s2, 4
      %s73 = int_to_ptr.hbm [resolvable:$true] %s72
      %75 = dma.vmem_to_hbm [thread:$0]  %s71, 128, %s73, [#allocation4]
    $region21: #{tpu_custom_call.1} parent=1 // pred_fallthru
      _
    // Predicated region
    $region22: #{tpu_custom_call.1} parent=1 // pred_check
      _
    $region23: #{tpu_custom_call.1} parent=1 // pred_check_branch
      %77 = sbr.rel (0) target = $region25
    $region24: #{tpu_custom_call.1} parent=1 // pred_region
      %79 = dma.done [#allocation4], 128
    $region25: #{tpu_custom_call.1} parent=1 // pred_fallthru
      _
    %80 = vsyncpa [#allocation3], 1
    %81 = vsyncpa [#allocation6], 1
    %82 = vsyncpa [#allocation4], 1

</llo_original>
